<compile_context>
chip_gen: v7x
topology: tpu7x:2x2x1
jax: 0.10.0
libtpu: 0.0.40
codegen_flags: <defaults>
</compile_context>

<pallas_src>
import functools
import math

import jax
import jax.numpy as jnp
from jax.experimental import pallas as pl
from jax.experimental.pallas import tpu as pltpu

LANES = 128
_SUBLANES = 8


def _tensorcores_per_chip():
    """v7x has 2 TensorCores per chip; v5e/v6e have 1. Default to 1 if unknown
    (a size-1 leading 'parallel' axis is harmless, an unused split is not)."""
    try:
        info = pltpu.get_tpu_info()
        for attr in ("num_cores", "tensorcore_count", "num_tensorcores", "cores_per_chip"):
            n = getattr(info, attr, None)
            if isinstance(n, int) and 1 <= n <= 8:
                return n
    except Exception:
        pass
    try:
        kind = jax.devices()[0].device_kind.lower()
        if "v7" in kind:
            return 2
    except Exception:
        pass
    return 1


def _default_tile_rows(num_cores):
    # v7x (~3.2 TB/s per TC): 4096 rows = 2 MiB/input/step keeps the fixed ~0.35us
    # per-step overhead under ~10%.  v5e/v6e (~0.8-1.4 TB/s): 2048 rows already does,
    # and bigger tiles just eat VMEM headroom.
    return 4096 if num_cores >= 2 else 2048


def _bre_sums_kernel(mp_ref, mq_ref, sig_ref, sq_out, e2s_out, s_out,
                     sq_acc, e2s_acc, s_acc):
    """Streaming reduction over the flat parameter vector viewed as (tile_rows, 128).

    Each tile is folded (tile_rows,128) -> (tile_rows//8, 8, 128) -> sum(axis=0):
    vreg-granular VPU adds only (no cross-sublane XLU reduce, no masked stores).
    Partials of (mean_post-mean_prior)^2, exp(2*sigma), sigma accumulate in (8,128)
    per-core VMEM scratch; the (8,128) partials are written to the output only on
    the last step of the inner (reduction) grid axis.  No masking: zero padding is
    corrected on the host (pads contribute exp(0)=1 only to the exp sum).
    """
    i = pl.program_id(1)  # inner reduction axis ("arbitrary")

    @pl.when(i == 0)
    def _():
        sq_acc[...] = jnp.zeros_like(sq_acc)
        e2s_acc[...] = jnp.zeros_like(e2s_acc)
        s_acc[...] = jnp.zeros_like(s_acc)

    mp = mp_ref[...]
    mq = mq_ref[...]
    sig = sig_ref[...]
    diff = mq - mp

    def fold(x):
        # (tile_rows, 128) -> (tile_rows//8, 8, 128); reduce the vreg-granular
        # leading axis (sum is order-agnostic, layout does not matter).
        return jnp.sum(x.reshape(-1, _SUBLANES, LANES), axis=0)

    sq_acc[...] += fold(diff * diff)
    e2s_acc[...] += fold(jnp.exp(2.0 * sig))
    s_acc[...] += fold(sig)

    @pl.when(i == pl.num_programs(1) - 1)
    def _():
        sq_out[...] = sq_acc[...]
        e2s_out[...] = e2s_acc[...]
        s_out[...] = s_acc[...]


def _plan_tiling(d_size, tile_rows_req, num_cores, force_num_splits=None):
    """Pick (tile_rows, num_splits, steps, rows_padded) for a flat vector of d_size.

    rows_padded is kept ~= round_up(cdiv(d_size,128), 8): after choosing the grid
    shape, tile_rows is shrunk so we never pad by a whole extra tile (this kernel is
    HBM-bandwidth bound, so padded rows are directly wasted wall-clock).
    """
    rows = pl.cdiv(d_size, LANES)
    rows8 = pl.cdiv(rows, _SUBLANES) * _SUBLANES
    tile_cap = max(_SUBLANES, min(int(tile_rows_req), 8192))
    tile_cap = (tile_cap // _SUBLANES) * _SUBLANES

    total_steps = max(1, pl.cdiv(rows8, tile_cap))
    if force_num_splits is not None:
        num_splits = max(1, int(force_num_splits))
    else:
        # Leading 'parallel' axis only pays off with >=2 TensorCores (v7x megacore);
        # on v5e/v6e it would only force extra padding + extra partial outputs.
        num_splits = 2 if (num_cores >= 2 and total_steps >= 2) else 1
    num_splits = min(num_splits, total_steps)
    steps = pl.cdiv(total_steps, num_splits)
    tile_rows = pl.cdiv(pl.cdiv(rows8, num_splits * steps), _SUBLANES) * _SUBLANES
    rows_padded = num_splits * steps * tile_rows
    return tile_rows, num_splits, steps, rows_padded


def prepare_pacbayes_params(mean_prior, mean_post, sigma_post_, *,
                            tile_rows=None, force_num_splits=None):
    """Pad + reshape the flat parameter vectors into the (rows_padded, 128) f32 layout
    expected by the kernel.  Do this ONCE (store parameters in this layout) rather than
    per loss call: jnp.pad re-materializes each array in HBM (an extra full HBM pass)."""
    d_size = mean_post.shape[0]
    num_cores = _tensorcores_per_chip()
    if tile_rows is None:
        tile_rows = _default_tile_rows(num_cores)
    tr, num_splits, steps, rows_padded = _plan_tiling(
        d_size, tile_rows, num_cores, force_num_splits=force_num_splits)
    padded = rows_padded * LANES

    def to2d(v):
        v = v.reshape(-1).astype(jnp.float32)
        if padded > d_size:
            v = jnp.pad(v, (0, padded - d_size))
        return v.reshape(rows_padded, LANES)

    meta = dict(d_size=d_size, tile_rows=tr, num_splits=num_splits, steps=steps)
    return (to2d(mean_prior), to2d(mean_post), to2d(sigma_post_)), meta


def bre_partial_sums_padded(mp2, mq2, sg2, *, d_size, tile_rows, num_splits, steps):
    """Pallas-reduced sums needed by the BRE/KL term, from padded (rows, 128) inputs."""
    rows_padded, lanes = mp2.shape
    assert lanes == LANES and rows_padded == num_splits * steps * tile_rows
    padded = rows_padded * LANES

    in_spec = pl.BlockSpec((tile_rows, LANES), lambda c, i: (c * steps + i, 0))
    out_spec = pl.BlockSpec((_SUBLANES, LANES), lambda c, i: (c, 0))
    out_shape = jax.ShapeDtypeStruct((num_splits * _SUBLANES, LANES), jnp.float32)

    tile_bytes = tile_rows * LANES * 4
    vmem_needed = 3 * 2 * tile_bytes + 6 * num_splits * _SUBLANES * LANES * 4
    # Explicit limit: lets large tiles compile on v5e (16 MiB default scoped VMEM)
    # while staying v7x-safe (<= 48 MiB of its 64 MiB physical VMEM).
    vmem_limit = int(min(max(2 * vmem_needed, 16 << 20), 48 << 20))

    sq_p, e2s_p, s_p = pl.pallas_call(
        _bre_sums_kernel,
        grid=(num_splits, steps),
        in_specs=[in_spec, in_spec, in_spec],
        out_specs=[out_spec, out_spec, out_spec],
        out_shape=[out_shape, out_shape, out_shape],
        scratch_shapes=[
            pltpu.VMEM((_SUBLANES, LANES), jnp.float32),
            pltpu.VMEM((_SUBLANES, LANES), jnp.float32),
            pltpu.VMEM((_SUBLANES, LANES), jnp.float32),
        ],
        compiler_params=pltpu.CompilerParams(
            dimension_semantics=("parallel", "arbitrary"),
            vmem_limit_bytes=vmem_limit,
        ),
        cost_estimate=pl.CostEstimate(
            flops=7 * padded,
            transcendentals=padded,
            bytes_accessed=3 * padded * 4 + 3 * num_splits * _SUBLANES * LANES * 4,
        ),
    )(mp2, mq2, sg2)

    # Final 1024-lane / per-core fold (negligible) in plain JAX.
    sq_norm = jnp.sum(sq_p)
    sum_sigma = jnp.sum(s_p)
    # Zero padding contributes exp(2*0) = 1 per pad element, only to the exp sum.
    # (Correctness note: assumes the padded region is exactly zero, as produced by
    #  prepare_pacbayes_params; do not pass reused/donated buffers with garbage tails.)
    sum_exp2s = jnp.sum(e2s_p) - jnp.float32(padded - d_size)
    return sq_norm, sum_exp2s, sum_sigma


def pac_bayes_bre_loss_padded(mp2, mq2, sg2, lambda_prior_, *, d_size, tile_rows,
                              num_splits, steps, precision, conf_param, bound, data_size):
    """Equivalent of PacBayesLoss.forward() on pre-padded params: returns (Bre_loss, kl)."""
    sq_norm, sum_exp2s, sum_sigma = bre_partial_sums_padded(
        mp2, mq2, sg2, d_size=d_size, tile_rows=tile_rows,
        num_splits=num_splits, steps=steps)

    inv_lambda = jnp.exp(-2.0 * lambda_prior_)            # 1 / lambda_prior variance
    kl = 0.5 * ((sum_exp2s + sq_norm) * inv_lambda
                - float(d_size)
                + 2.0 * float(d_size) * lambda_prior_
                - 2.0 * sum_sigma)

    log_union = 2.0 * jnp.log(precision * (math.log(bound) - 2.0 * lambda_prior_))
    log_conf = math.log((math.pi ** 2) * data_size / (6.0 * conf_param))
    bre = jnp.sqrt((kl + log_union + log_conf) / (2.0 * (data_size - 1.0)))
    return bre, kl


def pac_bayes_bre_loss(mean_prior, mean_post, sigma_post_, lambda_prior_,
                       precision, conf_param, bound, data_size, *, tile_rows=None):
    """Convenience flat-vector entry point.
    NOTE: this pads per call (an extra full HBM read+write pass over the three
    vectors); prefer prepare_pacbayes_params() once + pac_bayes_bre_loss_padded()."""
    (mp2, mq2, sg2), meta = prepare_pacbayes_params(
        mean_prior, mean_post, sigma_post_, tile_rows=tile_rows)
    return pac_bayes_bre_loss_padded(
        mp2, mq2, sg2, lambda_prior_, precision=precision, conf_param=conf_param,
        bound=bound, data_size=data_size, **meta)


def _reference(mean_prior, mean_post, sigma_post_, lambda_prior_,
               precision, conf_param, bound, data_size):
    """Pure-JAX reference for correctness checking."""
    d = mean_post.shape[0]
    sq_norm = jnp.sum((mean_post - mean_prior) ** 2)
    kl = 0.5 * ((jnp.sum(jnp.exp(2.0 * sigma_post_)) + sq_norm) * jnp.exp(-2.0 * lambda_prior_)
                - d + 2.0 * d * lambda_prior_ - 2.0 * jnp.sum(sigma_post_))
    log_union = 2.0 * jnp.log(precision * (math.log(bound) - 2.0 * lambda_prior_))
    log_conf = math.log((math.pi ** 2) * data_size / (6.0 * conf_param))
    return jnp.sqrt((kl + log_union + log_conf) / (2.0 * (data_size - 1.0))), kl


if __name__ == "__main__":
    precision, conf_param, bound, data_size = 100.0, 0.025, 0.1, 55000
    lambda_prior_ = jnp.float32(-3.0)

    def make_params(d_size, key):
        k1, k2, k3 = jax.random.split(key, 3)
        mean_prior = 0.05 * jax.random.normal(k1, (d_size,), dtype=jnp.float32)
        mean_post = mean_prior + 0.02 * jax.random.normal(k2, (d_size,), dtype=jnp.float32)
        sigma_post_ = -3.0 + 0.01 * jax.random.normal(k3, (d_size,), dtype=jnp.float32)
        return mean_prior, mean_post, sigma_post_

    key = jax.random.PRNGKey(0)
    ka, kb = jax.random.split(key)

    def run_case(params, **prep_kwargs):
        mean_prior, mean_post, sigma_post_ = params
        (mp2, mq2, sg2), meta = prepare_pacbayes_params(
            mean_prior, mean_post, sigma_post_, **prep_kwargs)
        loss_fn = jax.jit(functools.partial(
            pac_bayes_bre_loss_padded, precision=precision, conf_param=conf_param,
            bound=bound, data_size=data_size, **meta))
        bre, kl = loss_fn(mp2, mq2, sg2, lambda_prior_)
        jax.block_until_ready((bre, kl))
        bre_ref, kl_ref = _reference(mean_prior, mean_post, sigma_post_, lambda_prior_,
                                     precision, conf_param, bound, data_size)
        return (bre, kl), (bre_ref, kl_ref), meta

    # --- small case (d_size=2000): collapses to a single grid step (grid=(1,1)) ---
    params_small = make_params(2000, ka)
    (bre, kl), (bre_ref, kl_ref), _ = run_case(params_small)
    assert jnp.allclose(bre, bre_ref, rtol=1e-5, atol=1e-5), (bre, bre_ref)
    assert jnp.allclose(kl, kl_ref, rtol=1e-4, atol=1e-3), (kl, kl_ref)

    # --- larger case (d_size=300k): multi-step streaming reduction, chip-default plan ---
    params_big = make_params(300_000, kb)
    (bre2, kl2), (bre_ref2, kl_ref2), meta2 = run_case(params_big)
    assert jnp.allclose(bre2, bre_ref2, rtol=1e-3, atol=1e-4), (bre2, bre_ref2)
    assert jnp.allclose(kl2, kl_ref2, rtol=1e-3, atol=1.0), (kl2, kl_ref2)

    # --- same data, forced 2-way leading split: exercises the (parallel, arbitrary)
    #     megacore grid path for correctness even on single-TensorCore chips ---
    (bre3, kl3), (bre_ref3, kl_ref3), meta3 = run_case(
        params_big, tile_rows=1024, force_num_splits=2)
    assert meta3["num_splits"] == 2, meta3
    assert jnp.allclose(bre3, bre_ref3, rtol=1e-3, atol=1e-4), (bre3, bre_ref3)
    assert jnp.allclose(kl3, kl_ref3, rtol=1e-3, atol=1.0), (kl3, kl_ref3)

    print("KERNEL_OK")
</pallas_src>

<mosaic_0001>
module attributes {stable_mosaic.version = 11 : i64} {
  func.func @_bre_sums_kernel(%arg0: i32, %arg1: i32, %arg2: memref<16x128xf32, #tpu.memory_space<vmem>>, %arg3: memref<16x128xf32, #tpu.memory_space<vmem>>, %arg4: memref<16x128xf32, #tpu.memory_space<vmem>>, %arg5: memref<8x128xf32, #tpu.memory_space<vmem>>, %arg6: memref<8x128xf32, #tpu.memory_space<vmem>>, %arg7: memref<8x128xf32, #tpu.memory_space<vmem>>, %arg8: memref<8x128xf32, #tpu.memory_space<vmem>>, %arg9: memref<8x128xf32, #tpu.memory_space<vmem>>, %arg10: memref<8x128xf32, #tpu.memory_space<vmem>>) attributes {dimension_semantics = [#tpu.dimension_semantics<parallel>, #tpu.dimension_semantics<arbitrary>], iteration_bounds = array<i64: 1, 1>, scalar_prefetch = 0 : i64, scratch_operands = 3 : i64, tpu.core_type = #tpu.core_type<tc>, window_params = [{transform_indices = @transform_0, window_bounds = array<i64: 16, 128>}, {transform_indices = @transform_1, window_bounds = array<i64: 16, 128>}, {transform_indices = @transform_2, window_bounds = array<i64: 16, 128>}, {transform_indices = @transform_3, window_bounds = array<i64: 8, 128>}, {transform_indices = @transform_4, window_bounds = array<i64: 8, 128>}, {transform_indices = @transform_5, window_bounds = array<i64: 8, 128>}]} {
    %c0_i32 = arith.constant 0 : i32
    %0 = arith.cmpi eq, %arg1, %c0_i32 : i32
    %1 = arith.extui %0 : i1 to i32
    %c0_i32_0 = arith.constant 0 : i32
    %2 = arith.cmpi ne, %1, %c0_i32_0 : i32
    scf.if %2 {
      %cst_23 = arith.constant 0.000000e+00 : f32
      %29 = vector.broadcast %cst_23 : f32 to vector<8x128xf32>
      %c0_24 = arith.constant 0 : index
      %c0_25 = arith.constant 0 : index
      %30 = vector.load %arg8[%c0_24, %c0_25] : memref<8x128xf32, #tpu.memory_space<vmem>>, vector<8x128xf32>
      tpu.vector_store %arg8[%c0_24, %c0_25], %29 {strides = array<i32>} : memref<8x128xf32, #tpu.memory_space<vmem>>, vector<8x128xf32>,
      %cst_26 = arith.constant 0.000000e+00 : f32
      %31 = vector.broadcast %cst_26 : f32 to vector<8x128xf32>
      %c0_27 = arith.constant 0 : index
      %c0_28 = arith.constant 0 : index
      %32 = vector.load %arg9[%c0_27, %c0_28] : memref<8x128xf32, #tpu.memory_space<vmem>>, vector<8x128xf32>
      tpu.vector_store %arg9[%c0_27, %c0_28], %31 {strides = array<i32>} : memref<8x128xf32, #tpu.memory_space<vmem>>, vector<8x128xf32>,
      %cst_29 = arith.constant 0.000000e+00 : f32
      %33 = vector.broadcast %cst_29 : f32 to vector<8x128xf32>
      %c0_30 = arith.constant 0 : index
      %c0_31 = arith.constant 0 : index
      %34 = vector.load %arg10[%c0_30, %c0_31] : memref<8x128xf32, #tpu.memory_space<vmem>>, vector<8x128xf32>
      tpu.vector_store %arg10[%c0_30, %c0_31], %33 {strides = array<i32>} : memref<8x128xf32, #tpu.memory_space<vmem>>, vector<8x128xf32>,
    } else {
    }
    %c0 = arith.constant 0 : index
    %c0_1 = arith.constant 0 : index
    %3 = vector.load %arg2[%c0, %c0_1] : memref<16x128xf32, #tpu.memory_space<vmem>>, vector<16x128xf32>
    %c0_2 = arith.constant 0 : index
    %c0_3 = arith.constant 0 : index
    %4 = vector.load %arg3[%c0_2, %c0_3] : memref<16x128xf32, #tpu.memory_space<vmem>>, vector<16x128xf32>
    %c0_4 = arith.constant 0 : index
    %c0_5 = arith.constant 0 : index
    %5 = vector.load %arg4[%c0_4, %c0_5] : memref<16x128xf32, #tpu.memory_space<vmem>>, vector<16x128xf32>
    %6 = arith.subf %4, %3 : vector<16x128xf32>
    %c0_6 = arith.constant 0 : index
    %c0_7 = arith.constant 0 : index
    %7 = vector.load %arg8[%c0_6, %c0_7] : memref<8x128xf32, #tpu.memory_space<vmem>>, vector<8x128xf32>
    %8 = arith.mulf %6, %6 : vector<16x128xf32>
    %9 = vector.shape_cast %8 : vector<16x128xf32> to vector<2x8x128xf32>
    %cst = arith.constant dense<0.000000e+00> : vector<8x128xf32>
    %10 = vector.multi_reduction <add>, %9, %cst [0] : vector<2x8x128xf32> to vector<8x128xf32>
    %11 = arith.addf %7, %10 : vector<8x128xf32>
    %c0_8 = arith.constant 0 : index
    %c0_9 = arith.constant 0 : index
    %12 = vector.load %arg8[%c0_8, %c0_9] : memref<8x128xf32, #tpu.memory_space<vmem>>, vector<8x128xf32>
    tpu.vector_store %arg8[%c0_8, %c0_9], %11 {strides = array<i32>} : memref<8x128xf32, #tpu.memory_space<vmem>>, vector<8x128xf32>,
    %c0_10 = arith.constant 0 : index
    %c0_11 = arith.constant 0 : index
    %13 = vector.load %arg9[%c0_10, %c0_11] : memref<8x128xf32, #tpu.memory_space<vmem>>, vector<8x128xf32>
    %cst_12 = arith.constant 2.000000e+00 : f32
    %14 = vector.broadcast %cst_12 : f32 to vector<16x128xf32>
    %15 = arith.mulf %14, %5 : vector<16x128xf32>
    %16 = math.exp %15 : vector<16x128xf32>
    %17 = vector.shape_cast %16 : vector<16x128xf32> to vector<2x8x128xf32>
    %cst_13 = arith.constant dense<0.000000e+00> : vector<8x128xf32>
    %18 = vector.multi_reduction <add>, %17, %cst_13 [0] : vector<2x8x128xf32> to vector<8x128xf32>
    %19 = arith.addf %13, %18 : vector<8x128xf32>
    %c0_14 = arith.constant 0 : index
    %c0_15 = arith.constant 0 : index
    %20 = vector.load %arg9[%c0_14, %c0_15] : memref<8x128xf32, #tpu.memory_space<vmem>>, vector<8x128xf32>
    tpu.vector_store %arg9[%c0_14, %c0_15], %19 {strides = array<i32>} : memref<8x128xf32, #tpu.memory_space<vmem>>, vector<8x128xf32>,
    %c0_16 = arith.constant 0 : index
    %c0_17 = arith.constant 0 : index
    %21 = vector.load %arg10[%c0_16, %c0_17] : memref<8x128xf32, #tpu.memory_space<vmem>>, vector<8x128xf32>
    %22 = vector.shape_cast %5 : vector<16x128xf32> to vector<2x8x128xf32>
    %cst_18 = arith.constant dense<0.000000e+00> : vector<8x128xf32>
    %23 = vector.multi_reduction <add>, %22, %cst_18 [0] : vector<2x8x128xf32> to vector<8x128xf32>
    %24 = arith.addf %21, %23 : vector<8x128xf32>
    %c0_19 = arith.constant 0 : index
    %c0_20 = arith.constant 0 : index
    %25 = vector.load %arg10[%c0_19, %c0_20] : memref<8x128xf32, #tpu.memory_space<vmem>>, vector<8x128xf32>
    tpu.vector_store %arg10[%c0_19, %c0_20], %24 {strides = array<i32>} : memref<8x128xf32, #tpu.memory_space<vmem>>, vector<8x128xf32>,
    %c0_i32_21 = arith.constant 0 : i32
    %26 = arith.cmpi eq, %arg1, %c0_i32_21 : i32
    %27 = arith.extui %26 : i1 to i32
    %c0_i32_22 = arith.constant 0 : i32
    %28 = arith.cmpi ne, %27, %c0_i32_22 : i32
    scf.if %28 {
      %c0_23 = arith.constant 0 : index
      %c0_24 = arith.constant 0 : index
      %29 = vector.load %arg8[%c0_23, %c0_24] : memref<8x128xf32, #tpu.memory_space<vmem>>, vector<8x128xf32>
      %c0_25 = arith.constant 0 : index
      %c0_26 = arith.constant 0 : index
      %30 = vector.load %arg5[%c0_25, %c0_26] : memref<8x128xf32, #tpu.memory_space<vmem>>, vector<8x128xf32>
      tpu.vector_store %arg5[%c0_25, %c0_26], %29 {strides = array<i32>} : memref<8x128xf32, #tpu.memory_space<vmem>>, vector<8x128xf32>,
      %c0_27 = arith.constant 0 : index
      %c0_28 = arith.constant 0 : index
      %31 = vector.load %arg9[%c0_27, %c0_28] : memref<8x128xf32, #tpu.memory_space<vmem>>, vector<8x128xf32>
      %c0_29 = arith.constant 0 : index
      %c0_30 = arith.constant 0 : index
      %32 = vector.load %arg6[%c0_29, %c0_30] : memref<8x128xf32, #tpu.memory_space<vmem>>, vector<8x128xf32>
      tpu.vector_store %arg6[%c0_29, %c0_30], %31 {strides = array<i32>} : memref<8x128xf32, #tpu.memory_space<vmem>>, vector<8x128xf32>,
      %c0_31 = arith.constant 0 : index
      %c0_32 = arith.constant 0 : index
      %33 = vector.load %arg10[%c0_31, %c0_32] : memref<8x128xf32, #tpu.memory_space<vmem>>, vector<8x128xf32>
      %c0_33 = arith.constant 0 : index
      %c0_34 = arith.constant 0 : index
      %34 = vector.load %arg7[%c0_33, %c0_34] : memref<8x128xf32, #tpu.memory_space<vmem>>, vector<8x128xf32>
      tpu.vector_store %arg7[%c0_33, %c0_34], %33 {strides = array<i32>} : memref<8x128xf32, #tpu.memory_space<vmem>>, vector<8x128xf32>,
    } else {
    }
    return
  }
  func.func @transform_0(%arg0: i32, %arg1: i32) -> (i32, i32) {
    %c1_i32 = arith.constant 1 : i32
    %0 = arith.muli %arg0, %c1_i32 : i32
    %1 = arith.addi %0, %arg1 : i32
    %c0_i32 = arith.constant 0 : i32
    %c0_i32_0 = arith.constant 0 : i32
    return %1, %c0_i32 : i32, i32
  }
  func.func @transform_1(%arg0: i32, %arg1: i32) -> (i32, i32) {
    %c1_i32 = arith.constant 1 : i32
    %0 = arith.muli %arg0, %c1_i32 : i32
    %1 = arith.addi %0, %arg1 : i32
    %c0_i32 = arith.constant 0 : i32
    %c0_i32_0 = arith.constant 0 : i32
    return %1, %c0_i32 : i32, i32
  }
  func.func @transform_2(%arg0: i32, %arg1: i32) -> (i32, i32) {
    %c1_i32 = arith.constant 1 : i32
    %0 = arith.muli %arg0, %c1_i32 : i32
    %1 = arith.addi %0, %arg1 : i32
    %c0_i32 = arith.constant 0 : i32
    %c0_i32_0 = arith.constant 0 : i32
    return %1, %c0_i32 : i32, i32
  }
  func.func @transform_3(%arg0: i32, %arg1: i32) -> (i32, i32) {
    %c0_i32 = arith.constant 0 : i32
    %c0_i32_0 = arith.constant 0 : i32
    return %arg0, %c0_i32 : i32, i32
  }
  func.func @transform_4(%arg0: i32, %arg1: i32) -> (i32, i32) {
    %c0_i32 = arith.constant 0 : i32
    %c0_i32_0 = arith.constant 0 : i32
    return %arg0, %c0_i32 : i32, i32
  }
  func.func @transform_5(%arg0: i32, %arg1: i32) -> (i32, i32) {
    %c0_i32 = arith.constant 0 : i32
    %c0_i32_0 = arith.constant 0 : i32
    return %arg0, %c0_i32 : i32, i32
  }
}

</mosaic_0001>

<llo_original>
// kernel: pac_bayes_bre_loss_padded.1
$region0: #{pac_bayes_bre_loss_padded.1}
  #allocation0 [shape = 'u32[]', space=smem, size = 0x4, offset = 0x4, fixed_abs, tag = 'smem constant byte address 0x4 - core index']
  #allocation1 [shape = 'u32[144,128]{1,0:T(1,128)}', space=vmem, size = 0x12000, scoped, tag = 'internal scratch']
  #allocation2 [shape = 'f32[8,128]{1,0:T(8,128)}', space=vmem, size = 0x1000, scoped, tag = 'scratch operand']
  #allocation3 [shape = 'f32[8,128]{1,0:T(8,128)}', space=vmem, size = 0x1000, scoped, tag = 'scratch operand']
  #allocation4 [shape = 'f32[8,128]{1,0:T(8,128)}', space=vmem, size = 0x1000, scoped, tag = 'scratch operand']
  %s0 = inlined_call_operand.hbm [shape: f32[16,128], index: 0, kind: input, shape index: {}]
  %s1 = inlined_call_operand.hbm [shape: f32[16,128], index: 1, kind: input, shape index: {}]
  %s2 = inlined_call_operand.hbm [shape: f32[16,128], index: 2, kind: input, shape index: {}]
  %s3 = inlined_call_operand.vmem [shape: f32[8,128], index: 3, kind: output, shape index: {0}]
  %s4 = inlined_call_operand.vmem [shape: f32[8,128], index: 4, kind: output, shape index: {1}]
  %s5 = inlined_call_operand.vmem [shape: f32[8,128], index: 5, kind: output, shape index: {2}]
  %6 = xla_tuple %s3, %s4, %s5
  %s7 = sld [smem:[#allocation0]]
  $region58: #{pac_bayes_bre_loss_padded.1} parent=0
    _
  %s9 = ssub.s32 1, %s7
  %s10 = scalar_select 0, %s9, %s7
  $region1: #{pac_bayes_bre_loss_padded.1} parent=0
    #allocation5 [shape = 'u8[8192]{0}', space=vmem, size = 0x2000, scoped, tag = 'input window, operand 0, single buffered']
    #allocation6 [shape = 's32[1]{0}', space=sflag, size = 0x4, scoped, tag = 'scoped memory for pac_bayes_bre_loss_padded.1']
    #allocation7 [shape = 'u8[8192]{0}', space=vmem, size = 0x2000, scoped, tag = 'input window, operand 1, single buffered']
    #allocation8 [shape = 's32[1]{0}', space=sflag, size = 0x4, scoped, tag = 'scoped memory for pac_bayes_bre_loss_padded.1']
    #allocation9 [shape = 'u8[8192]{0}', space=vmem, size = 0x2000, scoped, tag = 'input window, operand 2, single buffered']
    %11 = vsyncpa [#allocation6], 0
    %12 = vsyncpa [#allocation8], 0
    // Predicated region
    $region2: #{pac_bayes_bre_loss_padded.1} parent=1 // pred_check
      _
    $region3: #{pac_bayes_bre_loss_padded.1} parent=1 // pred_check_branch
      %14 = sbr.rel (0) target = $region5
    $region4: #{pac_bayes_bre_loss_padded.1} parent=1 // pred_region
      %s15 = sadd.s32 0, 0
      %s16 = smul.u32 2, %s15
      %s18 = ssub.s32 256, 256
      %19 = vsyncadd [#allocation6], %s18
      %s20 = smul.addr %s16, 128
      %s21 = scalar_lea.hbm %s0, %s20
      %s22 = sshll.u32 [#allocation5], 4
      %s23 = int_to_ptr.vmem [resolvable:$true] %s22
      %28 = dma.hbm_to_vmem [thread:$0]  %s21, 256, %s23, [#allocation6], 128, 128, 8
    $region5: #{pac_bayes_bre_loss_padded.1} parent=1 // pred_fallthru
      _
    // Predicated region
    $region6: #{pac_bayes_bre_loss_padded.1} parent=1 // pred_check
      _
    $region7: #{pac_bayes_bre_loss_padded.1} parent=1 // pred_check_branch
      %30 = sbr.rel (0) target = $region9
    $region8: #{pac_bayes_bre_loss_padded.1} parent=1 // pred_region
      %s31 = sadd.s32 0, 0
      %s32 = smul.u32 2, %s31
      %s34 = ssub.s32 256, 256
      %35 = vsyncadd [#allocation8], %s34
      %s36 = smul.addr %s32, 128
      %s37 = scalar_lea.hbm %s1, %s36
      %s38 = sshll.u32 [#allocation7], 4
      %s39 = int_to_ptr.vmem [resolvable:$true] %s38
      %44 = dma.hbm_to_vmem [thread:$0]  %s37, 256, %s39, [#allocation8], 128, 128, 8
    $region9: #{pac_bayes_bre_loss_padded.1} parent=1 // pred_fallthru
      _
    // Predicated region
    $region10: #{pac_bayes_bre_loss_padded.1} parent=1 // pred_check
      _
    $region11: #{pac_bayes_bre_loss_padded.1} parent=1 // pred_check_branch
      %46 = sbr.rel (0) target = $region13
    $region12: #{pac_bayes_bre_loss_padded.1} parent=1 // pred_region
      %s47 = sadd.s32 0, 0
      %s48 = smul.u32 2, %s47
      %s50 = ssub.s32 256, 256
      %51 = vsyncadd [#allocation8], %s50
      %s52 = smul.addr %s48, 128
      %s53 = scalar_lea.hbm %s2, %s52
      %s54 = sshll.u32 [#allocation9], 4
      %s55 = int_to_ptr.vmem [resolvable:$true] %s54
      %60 = dma.hbm_to_vmem [thread:$0]  %s53, 256, %s55, [#allocation8], 128, 128, 8
    $region13: #{pac_bayes_bre_loss_padded.1} parent=1 // pred_fallthru
      _
    // Predicated region
    $region14: #{pac_bayes_bre_loss_padded.1} parent=1 // pred_check
      _
    $region15: #{pac_bayes_bre_loss_padded.1} parent=1 // pred_check_branch
      %62 = sbr.rel (0) target = $region17
    $region16: #{pac_bayes_bre_loss_padded.1} parent=1 // pred_region
      %63 = dma.done [#allocation6], 256
    $region17: #{pac_bayes_bre_loss_padded.1} parent=1 // pred_fallthru
      _
    // Predicated region
    $region18: #{pac_bayes_bre_loss_padded.1} parent=1 // pred_check
      _
    $region19: #{pac_bayes_bre_loss_padded.1} parent=1 // pred_check_branch
      %65 = sbr.rel (0) target = $region21
    $region20: #{pac_bayes_bre_loss_padded.1} parent=1 // pred_region
      %66 = dma.done [#allocation8], 256
    $region21: #{pac_bayes_bre_loss_padded.1} parent=1 // pred_fallthru
      _
    // Predicated region
    $region22: #{pac_bayes_bre_loss_padded.1} parent=1 // pred_check
      _
    $region23: #{pac_bayes_bre_loss_padded.1} parent=1 // pred_check_branch
      %68 = sbr.rel (0) target = $region25
    $region24: #{pac_bayes_bre_loss_padded.1} parent=1 // pred_region
      %69 = dma.done [#allocation8], 256
    $region25: #{pac_bayes_bre_loss_padded.1} parent=1 // pred_fallthru
      _
    %s70 = sadd.s32 0, 0
    %s71 = smul.u32 2, %s70
    %s72 = sadd.s32 0, 0
    %s73 = smul.u32 2, %s72
    %s74 = sadd.s32 0, 0
    %s75 = smul.u32 2, %s74
    %p76 = scmp.eq.s32.totalorder 0, 0
    // Predicated region
    $region26: #{pac_bayes_bre_loss_padded.1} parent=1 // pred_check
      %p77 = pneg %p76
    $region27: #{pac_bayes_bre_loss_padded.1} parent=1 // pred_check_branch
      %79 = sbr.rel (%p77) target = $region29
    $region28: #{pac_bayes_bre_loss_padded.1} parent=1 // pred_region
      %80 = vst [vmem:[#allocation2] sm:$0xff] 0.0
      %81 = vst [vmem:[#allocation3] sm:$0xff] 0.0
      %82 = vst [vmem:[#allocation4] sm:$0xff] 0.0
    $region29: #{pac_bayes_bre_loss_padded.1} parent=1 // pred_fallthru
      _
    %v83 = vld [vmem:[#allocation5] sm:$0xff]
    %v84 = vld [vmem:[#allocation5 + $0x8] sm:$0xff]
    %v85 = vld [vmem:[#allocation7] sm:$0xff]
    %v86 = vld [vmem:[#allocation7 + $0x8] sm:$0xff]
    %v87 = vld [vmem:[#allocation9] sm:$0xff]
    %v88 = vld [vmem:[#allocation9 + $0x8] sm:$0xff]
    %v89 = vsub.f32 %v85, %v83
    %v90 = vsub.f32 %v86, %v84
    %v91 = vld [vmem:[#allocation2] sm:$0xff]
    %v92 = vmul.f32 %v89, %v89
    %v93 = vmul.f32 %v90, %v90
    %v94 = vadd.f32 %v92, %v93
    %v95 = vadd.f32 %v91, %v94
    %96 = vst [vmem:[#allocation2] sm:$0xff] %v95
    %v97 = vld [vmem:[#allocation3] sm:$0xff]
    %v98 = vmul.f32 %v87, 2.0
    %v99 = vmul.f32 %v88, 2.0
    %v100 = vmul.f32 %v98, 1.442695
    %v101 = vpow.pop %v100
    %v102 = vmul.f32 %v99, 1.442695
    %v103 = vpow.pop %v102
    %v104 = vadd.f32 %v101, %v103
    %v105 = vadd.f32 %v97, %v104
    %106 = vst [vmem:[#allocation3] sm:$0xff] %v105
    %v107 = vld [vmem:[#allocation4] sm:$0xff]
    %v108 = vadd.f32 %v87, %v88
    %v109 = vadd.f32 %v107, %v108
    %110 = vst [vmem:[#allocation4] sm:$0xff] %v109
    // Predicated region
    $region30: #{pac_bayes_bre_loss_padded.1} parent=1 // pred_check
      %p111 = pneg %p76
    $region31: #{pac_bayes_bre_loss_padded.1} parent=1 // pred_check_branch
      %113 = sbr.rel (%p111) target = $region33
    $region32: #{pac_bayes_bre_loss_padded.1} parent=1 // pred_region
      %v114 = vld [vmem:[#allocation2] sm:$0xff]
      %115 = vst [vmem:[%s3] sm:$0xff] %v114
      %v116 = vld [vmem:[#allocation3] sm:$0xff]
      %117 = vst [vmem:[%s4] sm:$0xff] %v116
      %v118 = vld [vmem:[#allocation4] sm:$0xff]
      %119 = vst [vmem:[%s5] sm:$0xff] %v118
    $region33: #{pac_bayes_bre_loss_padded.1} parent=1 // pred_fallthru
      _
    // Predicated region
    $region34: #{pac_bayes_bre_loss_padded.1} parent=1 // pred_check
      _
    $region35: #{pac_bayes_bre_loss_padded.1} parent=1 // pred_check_branch
      %121 = sbr.rel (0) target = $region37
    $region36: #{pac_bayes_bre_loss_padded.1} parent=1 // pred_region
      _
    $region37: #{pac_bayes_bre_loss_padded.1} parent=1 // pred_fallthru
      _
    // Predicated region
    $region38: #{pac_bayes_bre_loss_padded.1} parent=1 // pred_check
      _
    $region39: #{pac_bayes_bre_loss_padded.1} parent=1 // pred_check_branch
      %123 = sbr.rel (0) target = $region41
    $region40: #{pac_bayes_bre_loss_padded.1} parent=1 // pred_region
      _
    $region41: #{pac_bayes_bre_loss_padded.1} parent=1 // pred_fallthru
      _
    // Predicated region
    $region42: #{pac_bayes_bre_loss_padded.1} parent=1 // pred_check
      _
    $region43: #{pac_bayes_bre_loss_padded.1} parent=1 // pred_check_branch
      %125 = sbr.rel (0) target = $region45
    $region44: #{pac_bayes_bre_loss_padded.1} parent=1 // pred_region
      _
    $region45: #{pac_bayes_bre_loss_padded.1} parent=1 // pred_fallthru
      _
    // Predicated region
    $region46: #{pac_bayes_bre_loss_padded.1} parent=1 // pred_check
      _
    $region47: #{pac_bayes_bre_loss_padded.1} parent=1 // pred_check_branch
      %127 = sbr.rel (0) target = $region49
    $region48: #{pac_bayes_bre_loss_padded.1} parent=1 // pred_region
      _
    $region49: #{pac_bayes_bre_loss_padded.1} parent=1 // pred_fallthru
      _
    // Predicated region
    $region50: #{pac_bayes_bre_loss_padded.1} parent=1 // pred_check
      _
    $region51: #{pac_bayes_bre_loss_padded.1} parent=1 // pred_check_branch
      %129 = sbr.rel (0) target = $region53
    $region52: #{pac_bayes_bre_loss_padded.1} parent=1 // pred_region
      _
    $region53: #{pac_bayes_bre_loss_padded.1} parent=1 // pred_fallthru
      _
    // Predicated region
    $region54: #{pac_bayes_bre_loss_padded.1} parent=1 // pred_check
      _
    $region55: #{pac_bayes_bre_loss_padded.1} parent=1 // pred_check_branch
      %131 = sbr.rel (0) target = $region57
    $region56: #{pac_bayes_bre_loss_padded.1} parent=1 // pred_region
      _
    $region57: #{pac_bayes_bre_loss_padded.1} parent=1 // pred_fallthru
      _
    %132 = vsyncpa [#allocation6], 1
    %133 = vsyncpa [#allocation8], 1

</llo_original>
